<compile_context>
chip_gen: v5e
topology: v5e:2x2
jax: 0.10.0
libtpu: 0.0.40
codegen_flags: <defaults>
</compile_context>

<pallas_src>
import functools

import jax
import jax.numpy as jnp
from jax.experimental import pallas as pl
from jax.experimental.pallas import tpu as pltpu

HIDDEN = 32
MAX_BATCH_TILE = 512  # rows per grid step when batch is large


def _value_net_kernel(x_ref, w1_ref, w2_ref, aux_ref, o_ref):
    """Fused fc1+relu -> fc2+relu -> (VPU matvec + bias), tiles in VMEM."""
    x = x_ref[...]                                  # bf16 [tile_b, num_states]
    aux = aux_ref[...]                              # f32  [4, 32]
    b1 = aux[0:1, :]                                # (1, 32)
    b2 = aux[1:2, :]                                # (1, 32)
    w3_row = aux[2:3, :]                            # (1, 32)
    b3 = aux[3:4, 0:1]                              # (1, 1)

    # fc1 + ReLU (bf16 MXU operands, f32 accumulation)
    h1 = jnp.dot(x, w1_ref[...], preferred_element_type=jnp.float32)
    h1 = jnp.maximum(h1 + b1, 0.0)

    # TODO(synk): dropout(p=0.1) is inference-mode identity; training-mode
    # would need pltpu.prng_seed + pltpu.prng_random_bits masking.

    # fc2 + ReLU
    h2 = jnp.dot(h1.astype(jnp.bfloat16), w2_ref[...],
                 preferred_element_type=jnp.float32)
    h2 = jnp.maximum(h2 + b2, 0.0)

    # out: [B,32]@[32,1] degenerates to a VPU mul + lane (XLU) reduction.
    out = jnp.sum(h2 * w3_row, axis=-1, keepdims=True) + b3
    o_ref[...] = out.astype(o_ref.dtype)


@jax.jit
def value_network_forward(state, w1, b1, w2, b2, w3, b3):
    """state: [B, num_states] f32 -> [B, 1] f32."""
    B, num_states = state.shape

    # Pack small per-layer constants into one lane-aligned aux buffer:
    #   row 0: b1, row 1: b2, row 2: w3 (as a row), row 3: [b3, 0, ...]
    b1r = b1.reshape(1, HIDDEN).astype(jnp.float32)
    b2r = b2.reshape(1, HIDDEN).astype(jnp.float32)
    w3r = w3.reshape(1, HIDDEN).astype(jnp.float32)
    b3r = jnp.pad(b3.reshape(1, 1).astype(jnp.float32),
                  ((0, 0), (0, HIDDEN - 1)))
    aux = jnp.concatenate([b1r, b2r, w3r, b3r], axis=0)      # (4, 32) f32

    # bf16 MXU operands (accumulation stays f32 inside the kernel).
    x_bf16 = state.astype(jnp.bfloat16)
    w1_bf16 = w1.astype(jnp.bfloat16)
    w2_bf16 = w2.astype(jnp.bfloat16)

    # Batch tiling: whole batch in one block when small, else 512-row tiles
    # pipelined over a 1-D grid (weights stay resident).
    tile_b = B if B <= MAX_BATCH_TILE else MAX_BATCH_TILE
    grid = (pl.cdiv(B, tile_b),)

    return pl.pallas_call(
        _value_net_kernel,
        out_shape=jax.ShapeDtypeStruct((B, 1), jnp.float32),
        grid=grid,
        in_specs=[
            pl.BlockSpec((tile_b, num_states), lambda i: (i, 0)),   # x
            pl.BlockSpec((num_states, HIDDEN), lambda i: (0, 0)),   # w1
            pl.BlockSpec((HIDDEN, HIDDEN), lambda i: (0, 0)),       # w2
            pl.BlockSpec((4, HIDDEN), lambda i: (0, 0)),            # aux
        ],
        out_specs=pl.BlockSpec((tile_b, 1), lambda i: (i, 0)),
        compiler_params=pltpu.CompilerParams(
            dimension_semantics=("parallel",)),
    )(x_bf16, w1_bf16, w2_bf16, aux)


def init_params(key, num_states):
    """Init matching the PyTorch module:
    fc1/fc2: kaiming_uniform_(nonlinearity='relu') -> bound = sqrt(2)*sqrt(3/fan_in)
    out.weight: uniform(-3e-3, 3e-3)
    all biases: nn.Linear default uniform(-1/sqrt(fan_in), 1/sqrt(fan_in)).
    Weights stored as [in, out] (transpose of torch's [out, in])."""
    k1, k2, k3, kb1, kb2, kb3 = jax.random.split(key, 6)

    def kaiming_uniform_relu(k, fan_in, fan_out):
        bound = jnp.sqrt(2.0) * jnp.sqrt(3.0 / fan_in)
        return jax.random.uniform(k, (fan_in, fan_out), jnp.float32,
                                  minval=-bound, maxval=bound)

    def bias_default(k, fan_in, fan_out):
        bound = 1.0 / jnp.sqrt(fan_in)
        return jax.random.uniform(k, (1, fan_out), jnp.float32,
                                  minval=-bound, maxval=bound)

    w1 = kaiming_uniform_relu(k1, num_states, HIDDEN)
    b1 = bias_default(kb1, num_states, HIDDEN)
    w2 = kaiming_uniform_relu(k2, HIDDEN, HIDDEN)
    b2 = bias_default(kb2, HIDDEN, HIDDEN)
    w3 = jax.random.uniform(k3, (HIDDEN, 1), jnp.float32,
                            minval=-0.003, maxval=0.003)
    b3 = bias_default(kb3, HIDDEN, 1)
    return w1, b1, w2, b2, w3, b3


def reference_forward_f32(state, w1, b1, w2, b2, w3, b3):
    h1 = jnp.maximum(state @ w1 + b1, 0.0)
    h2 = jnp.maximum(h1 @ w2 + b2, 0.0)
    return h2 @ w3 + b3


def reference_forward_bf16(state, w1, b1, w2, b2, w3, b3):
    """Reference that mirrors the kernel's bf16-operand / f32-accumulate math."""
    xb = state.astype(jnp.bfloat16)
    w1b = w1.astype(jnp.bfloat16)
    w2b = w2.astype(jnp.bfloat16)
    h1 = jnp.maximum(
        jnp.dot(xb, w1b, preferred_element_type=jnp.float32) + b1, 0.0)
    h2 = jnp.maximum(
        jnp.dot(h1.astype(jnp.bfloat16), w2b,
                preferred_element_type=jnp.float32) + b2, 0.0)
    return jnp.sum(h2 * w3.reshape(1, HIDDEN), axis=-1, keepdims=True) + b3


if __name__ == "__main__":
    key = jax.random.PRNGKey(0)
    k_param, k_state = jax.random.split(key)

    batch = 8
    num_states = 16

    params = init_params(k_param, num_states)
    state = jax.random.normal(k_state, (batch, num_states), jnp.float32)

    out = value_network_forward(state, *params)
    out = jax.block_until_ready(out)
    assert out.shape == (batch, 1), out.shape

    # Exact-path check against a bf16-consistent reference.
    ref_bf16 = reference_forward_bf16(state, *params)
    assert jnp.allclose(out, ref_bf16, atol=1e-3, rtol=1e-3), \
        "mismatch vs bf16-consistent reference"

    # Semantic sanity check against the pure-f32 PyTorch-equivalent forward.
    ref_f32 = reference_forward_f32(state, *params)
    assert jnp.allclose(out, ref_f32, atol=1e-2, rtol=5e-2), \
        "mismatch vs f32 reference beyond bf16 tolerance"

    print("KERNEL_OK")
</pallas_src>

<mosaic_0001>
module attributes {stable_mosaic.version = 11 : i64} {
  func.func @_value_net_kernel(%arg0: i32, %arg1: memref<8x16xbf16, #tpu.memory_space<vmem>>, %arg2: memref<16x32xbf16, #tpu.memory_space<vmem>>, %arg3: memref<32x32xbf16, #tpu.memory_space<vmem>>, %arg4: memref<4x32xf32, #tpu.memory_space<vmem>>, %arg5: memref<8x1xf32, #tpu.memory_space<vmem>>) attributes {dimension_semantics = [#tpu.dimension_semantics<parallel>], iteration_bounds = array<i64: 1>, scalar_prefetch = 0 : i64, scratch_operands = 0 : i64, tpu.core_type = #tpu.core_type<tc>, window_params = [{transform_indices = @transform_0, window_bounds = array<i64: 8, 16>}, {pipeline_mode = #tpu.pipeline_mode<synchronous>, transform_indices = @transform_1, window_bounds = array<i64: 16, 32>}, {pipeline_mode = #tpu.pipeline_mode<synchronous>, transform_indices = @transform_2, window_bounds = array<i64: 32, 32>}, {pipeline_mode = #tpu.pipeline_mode<synchronous>, transform_indices = @transform_3, window_bounds = array<i64: 4, 32>}, {transform_indices = @transform_4, window_bounds = array<i64: 8, 1>}]} {
    %c0 = arith.constant 0 : index
    %c0_0 = arith.constant 0 : index
    %0 = vector.load %arg1[%c0, %c0_0] : memref<8x16xbf16, #tpu.memory_space<vmem>>, vector<8x16xbf16>
    %c0_1 = arith.constant 0 : index
    %c0_2 = arith.constant 0 : index
    %1 = vector.load %arg4[%c0_1, %c0_2] : memref<4x32xf32, #tpu.memory_space<vmem>>, vector<4x32xf32>
    %2 = vector.extract_strided_slice %1 {offsets = [0, 0], sizes = [1, 32], strides = [1, 1]} : vector<4x32xf32> to vector<1x32xf32>
    %3 = vector.extract_strided_slice %1 {offsets = [1, 0], sizes = [1, 32], strides = [1, 1]} : vector<4x32xf32> to vector<1x32xf32>
    %4 = vector.extract_strided_slice %1 {offsets = [2, 0], sizes = [1, 32], strides = [1, 1]} : vector<4x32xf32> to vector<1x32xf32>
    %5 = vector.extract_strided_slice %1 {offsets = [3, 0], sizes = [1, 1], strides = [1, 1]} : vector<4x32xf32> to vector<1x1xf32>
    %c0_3 = arith.constant 0 : index
    %c0_4 = arith.constant 0 : index
    %6 = vector.load %arg2[%c0_3, %c0_4] : memref<16x32xbf16, #tpu.memory_space<vmem>>, vector<16x32xbf16>
    %cst = arith.constant dense<0.000000e+00> : vector<8x32xf32>
    %7 = tpu.matmul %0, %6, %cst {dimension_numbers = #tpu.dot_dimension_numbers<[1], [0], [0], [1], [0, 0, 1, 1], [], []>} : vector<8x16xbf16>, vector<16x32xbf16>, vector<8x32xf32> -> vector<8x32xf32>
    %8 = vector.broadcast %2 : vector<1x32xf32> to vector<8x32xf32>
    %9 = arith.addf %7, %8 : vector<8x32xf32>
    %cst_5 = arith.constant 0.000000e+00 : f32
    %10 = vector.broadcast %cst_5 : f32 to vector<8x32xf32>
    %11 = arith.maximumf %9, %10 : vector<8x32xf32>
    %12 = arith.truncf %11 : vector<8x32xf32> to vector<8x32xbf16>
    %c0_6 = arith.constant 0 : index
    %c0_7 = arith.constant 0 : index
    %13 = vector.load %arg3[%c0_6, %c0_7] : memref<32x32xbf16, #tpu.memory_space<vmem>>, vector<32x32xbf16>
    %cst_8 = arith.constant dense<0.000000e+00> : vector<8x32xf32>
    %14 = tpu.matmul %12, %13, %cst_8 {dimension_numbers = #tpu.dot_dimension_numbers<[1], [0], [0], [1], [0, 0, 1, 1], [], []>} : vector<8x32xbf16>, vector<32x32xbf16>, vector<8x32xf32> -> vector<8x32xf32>
    %15 = vector.broadcast %3 : vector<1x32xf32> to vector<8x32xf32>
    %16 = arith.addf %14, %15 : vector<8x32xf32>
    %cst_9 = arith.constant 0.000000e+00 : f32
    %17 = vector.broadcast %cst_9 : f32 to vector<8x32xf32>
    %18 = arith.maximumf %16, %17 : vector<8x32xf32>
    %19 = vector.broadcast %4 : vector<1x32xf32> to vector<8x32xf32>
    %20 = arith.mulf %18, %19 : vector<8x32xf32>
    %cst_10 = arith.constant dense<0.000000e+00> : vector<8xf32>
    %21 = vector.multi_reduction <add>, %20, %cst_10 [1] : vector<8x32xf32> to vector<8xf32>
    %22 = vector.shape_cast %21 : vector<8xf32> to vector<8x1xf32>
    %23 = vector.broadcast %5 : vector<1x1xf32> to vector<8x1xf32>
    %24 = arith.addf %22, %23 : vector<8x1xf32>
    %c0_11 = arith.constant 0 : index
    %c0_12 = arith.constant 0 : index
    %25 = vector.load %arg5[%c0_11, %c0_12] : memref<8x1xf32, #tpu.memory_space<vmem>>, vector<8x1xf32>
    tpu.vector_store %arg5[%c0_11, %c0_12], %24 {strides = array<i32>} : memref<8x1xf32, #tpu.memory_space<vmem>>, vector<8x1xf32>,
    return
  }
  func.func @transform_0(%arg0: i32) -> (i32, i32) {
    %c0_i32 = arith.constant 0 : i32
    %c0_i32_0 = arith.constant 0 : i32
    return %arg0, %c0_i32 : i32, i32
  }
  func.func @transform_1(%arg0: i32) -> (i32, i32) {
    %c0_i32 = arith.constant 0 : i32
    %c0_i32_0 = arith.constant 0 : i32
    %c0_i32_1 = arith.constant 0 : i32
    return %c0_i32, %c0_i32_0 : i32, i32
  }
  func.func @transform_2(%arg0: i32) -> (i32, i32) {
    %c0_i32 = arith.constant 0 : i32
    %c0_i32_0 = arith.constant 0 : i32
    %c0_i32_1 = arith.constant 0 : i32
    return %c0_i32, %c0_i32_0 : i32, i32
  }
  func.func @transform_3(%arg0: i32) -> (i32, i32) {
    %c0_i32 = arith.constant 0 : i32
    %c0_i32_0 = arith.constant 0 : i32
    %c0_i32_1 = arith.constant 0 : i32
    return %c0_i32, %c0_i32_0 : i32, i32
  }
  func.func @transform_4(%arg0: i32) -> (i32, i32) {
    %c0_i32 = arith.constant 0 : i32
    %c0_i32_0 = arith.constant 0 : i32
    return %arg0, %c0_i32 : i32, i32
  }
}

</mosaic_0001>

<llo_original>
// kernel: value_network_forward.1
$region0: #{value_network_forward.1}
  #allocation0 [shape = 'u32[]', space=smem, size = 0x4, offset = 0x4, fixed_abs, tag = 'smem constant byte address 0x4 - core index']
  #allocation1 [shape = 'u32[72,128]{1,0:T(1,128)}', space=vmem, size = 0x9000, scoped, tag = 'internal scratch']
  %s0 = inlined_call_operand.vmem [shape: bf16[8,16], index: 0, kind: input, shape index: {}]
  %s1 = inlined_call_operand.vmem [shape: bf16[16,32], index: 1, kind: input, shape index: {}]
  %s2 = inlined_call_operand.vmem [shape: bf16[32,32], index: 2, kind: input, shape index: {}]
  %s3 = inlined_call_operand.vmem [shape: f32[4,32], index: 3, kind: input, shape index: {}]
  %s4 = inlined_call_operand.vmem [shape: f32[8,1], index: 4, kind: output, shape index: {}]
  %s5 = sld [smem:[#allocation0]]
  $region26: #{value_network_forward.1} parent=0
    _
  %s7 = ssub.s32 1, %s5
  %s8 = scalar_select 0, %s7, %s5
  // Predicated region
  $region2: #{value_network_forward.1} parent=0 // pred_check
    _
  $region3: #{value_network_forward.1} parent=0 // pred_check_branch
    %10 = sbr.rel (0) target = $region5
  $region4: #{value_network_forward.1} parent=0 // pred_region
    _
  $region5: #{value_network_forward.1} parent=0 // pred_fallthru
    _
  // Predicated region
  $region6: #{value_network_forward.1} parent=0 // pred_check
    _
  $region7: #{value_network_forward.1} parent=0 // pred_check_branch
    %12 = sbr.rel (0) target = $region9
  $region8: #{value_network_forward.1} parent=0 // pred_region
    _
  $region9: #{value_network_forward.1} parent=0 // pred_fallthru
    _
  // Predicated region
  $region10: #{value_network_forward.1} parent=0 // pred_check
    _
  $region11: #{value_network_forward.1} parent=0 // pred_check_branch
    %14 = sbr.rel (0) target = $region13
  $region12: #{value_network_forward.1} parent=0 // pred_region
    _
  $region13: #{value_network_forward.1} parent=0 // pred_fallthru
    _
  // Predicated region
  $region14: #{value_network_forward.1} parent=0 // pred_check
    _
  $region15: #{value_network_forward.1} parent=0 // pred_check_branch
    %16 = sbr.rel (0) target = $region17
  $region16: #{value_network_forward.1} parent=0 // pred_region
    _
  $region17: #{value_network_forward.1} parent=0 // pred_fallthru
    _
  %v18 = vld [vmem:[%s0] sm:$0xf]
  %v19 = vld [vmem:[%s3] sm:$0xf]
  %v20 = vld [vmem:[%s1] sm:$0xf]
  %v21 = vld [vmem:[%s1 + $0x4] sm:$0xf]
  %v22 = vperm.slane %v19, 0
  %v25 = vunpack.c.l.b16 %v20
  %v26 = vunpack.c.l.b16 %v21
  %v27 = vpack.c.b16 %v26, %v25
  %vm29 = vcmask 130048
  %v31 = vsel %vm29, %v18, 0
  %33 = vmatpush.bf16.msra.mxu0 0
  %34 = vmatpush.bf16.msra.mxu0 0
  %35 = vmatpush.bf16.msra.mxu0 0
  %36 = vmatpush.bf16.msra.mxu0 0
  %37 = vmatpush.bf16.msra.mxu0 0
  %38 = vmatpush.bf16.msra.mxu0 0
  %39 = vmatpush.bf16.msra.mxu0 0
  %40 = vmatpush.bf16.msra.mxu0 %v27
  %41 = vmatmul.bf16.gmra.mxu0 %v31
  %v42 = vpop.f32.mrf.mxu0
  %v43 = vadd.f32 %v22, %v42
  %v44 = vpop.f32.mrf.mxu0
  %45 = vdwg.mxu0
  %v46 = vmax.f32 %v43, 0.0
  %v47 = vpack.c.bf16 %v46, %v46
  %v48 = vld [vmem:[%s2] sm:$0xf]
  %v49 = vld [vmem:[%s2 + $0x4] sm:$0xf]
  %v50 = vld [vmem:[%s2 + $0x8] sm:$0xf]
  %v51 = vld [vmem:[%s2 + $0xc] sm:$0xf]
  %v52 = vperm.slane %v19, 1
  %v57 = vunpack.c.l.b16 %v48
  %v58 = vunpack.c.l.b16 %v49
  %v59 = vunpack.c.l.b16 %v50
  %v60 = vunpack.c.l.b16 %v51
  %v61 = vpack.c.b16 %v58, %v57
  %v62 = vpack.c.b16 %v60, %v59
  %vm65 = vcmask 261120
  %v67 = vsel %vm65, %v47, 0
  %69 = vmatpush.bf16.msra.mxu0 0
  %70 = vmatpush.bf16.msra.mxu0 0
  %71 = vmatpush.bf16.msra.mxu0 0
  %72 = vmatpush.bf16.msra.mxu0 0
  %73 = vmatpush.bf16.msra.mxu0 0
  %74 = vmatpush.bf16.msra.mxu0 0
  %75 = vmatpush.bf16.msra.mxu0 %v62
  %76 = vmatpush.bf16.msra.mxu0 %v61
  %77 = vmatmul.bf16.gmra.mxu0 %v67
  %v78 = vpop.f32.mrf.mxu0
  %v79 = vadd.f32 %v52, %v78
  %v80 = vpop.f32.mrf.mxu0
  %81 = vdwg.mxu0
  %v82 = vmax.f32 %v79, 0.0
  %v83 = vperm.slane %v19, 2
  %v84 = vmul.f32 %v82, %v83
  %v85 = vsel %vm65, %v84, 0.0
  %86 = vadd.xlane.f32.xlu0 %v85
  %v87 = vpop.xlane.xlu0 %86
  %v88 = vperm.slane %v19, 3
  %v89 = vadd.f32 %v87, %v88
  %vm90 = vcmask 7168
  %91 = vst.msk [vmem:[%s4] sm:$0xff] %vm90, %v89
  // Predicated region
  $region18: #{value_network_forward.1} parent=0 // pred_check
    _
  $region19: #{value_network_forward.1} parent=0 // pred_check_branch
    %93 = sbr.rel (0) target = $region21
  $region20: #{value_network_forward.1} parent=0 // pred_region
    _
  $region21: #{value_network_forward.1} parent=0 // pred_fallthru
    _
  // Predicated region
  $region22: #{value_network_forward.1} parent=0 // pred_check
    _
  $region23: #{value_network_forward.1} parent=0 // pred_check_branch
    %95 = sbr.rel (0) target = $region25
  $region24: #{value_network_forward.1} parent=0 // pred_region
    _
  $region25: #{value_network_forward.1} parent=0 // pred_fallthru
    _

</llo_original>
